<compile_context>
chip_gen: v7x
topology: tpu7x:2x2x1
jax: 0.10.0
libtpu: 0.0.40
codegen_flags: <defaults>
</compile_context>

<pallas_src>
import math

import jax
import jax.numpy as jnp
from jax.experimental import pallas as pl
from jax.experimental.pallas import tpu as pltpu


# ----------------------------------------------------------------------------
# Per-generation tuning knobs.
# ----------------------------------------------------------------------------
def _tpu_gen_params():
    """threshold: min contiguous bytes/row below which we use the VMEM path."""
    try:
        kind = jax.devices()[0].device_kind.lower()
    except Exception:  # pragma: no cover - defensive
        kind = ""
    if "v7" in kind or "7x" in kind:
        # 64 MiB physical VMEM, 3.2 TB/s HBM: fall back to VMEM path early,
        # keep double-buffered working set well under the scoped limit.
        return dict(threshold=4096, vmem_budget=24 << 20, vmem_limit=32 << 20)
    if "v6" in kind:
        # 128 MiB VMEM: exploit it with big tiles (>=512 rows where possible).
        return dict(threshold=1024, vmem_budget=64 << 20, vmem_limit=100 << 20)
    if "v5" in kind:
        # Slower HBM hides per-line DMA overhead; keep the DMA path longer.
        return dict(threshold=512, vmem_budget=48 << 20, vmem_limit=64 << 20)
    # Unknown: conservative middle ground.
    return dict(threshold=1024, vmem_budget=24 << 20, vmem_limit=32 << 20)


# ----------------------------------------------------------------------------
# Path 1: raw HBM->HBM DMA copies (wide / contiguous segments).
# ----------------------------------------------------------------------------
def _num_chunks(nbytes, total_bytes, outer):
    """Split a dominant input's copy across the outer dim (2-4 sub-copies)."""
    if outer < 2:
        return 1
    frac = nbytes / max(total_bytes, 1)
    if frac >= 0.5:
        c = 4
    elif frac >= 0.25:
        c = 2
    else:
        c = 1
    return min(c, outer)


def _build_dma_plan(inner_sizes, outer, itemsize):
    """Static copy plan: list of (input_idx, row0, row1, col_off, col_size)."""
    offs, o = [], 0
    for s in inner_sizes:
        offs.append(o)
        o += s
    total_bytes = outer * o * itemsize
    plan = []
    for idx, (s, off) in enumerate(zip(inner_sizes, offs)):
        nbytes = outer * s * itemsize
        c = _num_chunks(nbytes, total_bytes, outer)
        base, rem, r0 = outer // c, outer % c, 0
        for j in range(c):
            rows = base + (1 if j < rem else 0)
            if rows == 0:
                continue
            r1 = r0 + rows
            plan.append((rows * s * itemsize, idx, r0, r1, off, s))
            r0 = r1
    # Issue largest copies first so DMA engines start on the big transfers.
    plan.sort(key=lambda t: t[0], reverse=True)
    return [(idx, r0, r1, off, s) for (_, idx, r0, r1, off, s) in plan]


def _make_dma_concat_kernel(plan, num_inputs):
    def kernel(*refs):
        in_refs = refs[:num_inputs]
        out_ref = refs[num_inputs]
        sem = refs[num_inputs + 1]
        copies = []
        for j, (idx, r0, r1, off, s) in enumerate(plan):
            cp = pltpu.make_async_copy(
                in_refs[idx].at[r0:r1, :],
                out_ref.at[r0:r1, off:off + s],
                sem.at[j],
            )
            cp.start()
            copies.append(cp)
        # All copies issued (run concurrently on the DMA engines); now wait.
        for cp in copies:
            cp.wait()
    return kernel


def _concat_via_dma(xs2d, inner_sizes, outer, total_inner, dtype, itemsize):
    plan = _build_dma_plan(inner_sizes, outer, itemsize)
    kernel = _make_dma_concat_kernel(plan, len(xs2d))
    total_bytes = outer * total_inner * itemsize
    return pl.pallas_call(
        kernel,
        out_shape=jax.ShapeDtypeStruct((outer, total_inner), dtype),
        in_specs=[pl.BlockSpec(memory_space=pl.ANY) for _ in xs2d],
        out_specs=pl.BlockSpec(memory_space=pl.ANY),
        scratch_shapes=[pltpu.SemaphoreType.DMA((len(plan),))],
        cost_estimate=pl.CostEstimate(
            flops=0, transcendentals=0, bytes_accessed=2 * total_bytes),
    )(*xs2d)


# ----------------------------------------------------------------------------
# Path 2: tiled VMEM-staged copy (narrow segments; lane-dense output block).
# ----------------------------------------------------------------------------
def _make_vmem_concat_kernel(inner_sizes, lane_aligned):
    n = len(inner_sizes)
    offs, o = [], 0
    for s in inner_sizes:
        offs.append(o)
        o += s

    if lane_aligned:
        # All spans are 128-lane aligned: direct slice stores (pure copies).
        def kernel(*refs):
            out_ref = refs[n]
            for src, off, s in zip(refs[:n], offs, inner_sizes):
                out_ref[:, off:off + s] = src[...]
    else:
        # Unaligned spans: let Mosaic handle the lane relayout via concat.
        def kernel(*refs):
            out_ref = refs[n]
            out_ref[...] = jnp.concatenate([r[...] for r in refs[:n]], axis=-1)
    return kernel


def _select_tile_outer(outer, total_inner, itemsize, vmem_budget):
    # Double-buffered inputs + output ~= 4 * tile * total_inner * itemsize.
    denom = max(4 * total_inner * itemsize, 1)
    tile = vmem_budget // denom
    tile = min(tile, 2048)            # diminishing returns past ~1024 rows
    tile = max(8, (tile // 8) * 8)    # sublane-aligned
    if tile >= outer:
        return outer                  # full-extent block (always legal)
    return tile


def _concat_via_vmem(xs2d, inner_sizes, outer, total_inner, dtype, itemsize,
                     gen):
    tile = _select_tile_outer(outer, total_inner, itemsize, gen["vmem_budget"])
    lane_aligned = all(s % 128 == 0 for s in inner_sizes)
    kernel = _make_vmem_concat_kernel(inner_sizes, lane_aligned)
    total_bytes = outer * total_inner * itemsize
    grid = (pl.cdiv(outer, tile),)
    return pl.pallas_call(
        kernel,
        out_shape=jax.ShapeDtypeStruct((outer, total_inner), dtype),
        grid=grid,
        in_specs=[pl.BlockSpec((tile, s), lambda i: (i, 0))
                  for s in inner_sizes],
        out_specs=pl.BlockSpec((tile, total_inner), lambda i: (i, 0)),
        compiler_params=pltpu.CompilerParams(
            dimension_semantics=("parallel",),
            vmem_limit_bytes=gen["vmem_limit"]),
        cost_estimate=pl.CostEstimate(
            flops=0, transcendentals=0, bytes_accessed=2 * total_bytes),
    )(*xs2d)


# ----------------------------------------------------------------------------
# Wrapper: torch.cat(xs, dim=dim) semantics.
# ----------------------------------------------------------------------------
_SUBBYTE_TAGS = ("int4", "uint4", "float4")


def pallas_concat(xs, dim):
    xs = list(xs)
    if len(xs) == 0:
        raise ValueError("pallas_concat: need at least one input tensor")
    if len(xs) == 1:
        return xs[0]

    ndim = xs[0].ndim
    dim = dim % ndim

    # torch.cat type-promotes mixed dtypes; mirror that (wrapper-side cast).
    dtype = jnp.result_type(*[x.dtype for x in xs])
    xs = [x.astype(dtype) if x.dtype != dtype else x for x in xs]

    # All non-concat dims must match.
    for x in xs:
        assert x.ndim == ndim
        for d in range(ndim):
            if d != dim:
                assert x.shape[d] == xs[0].shape[d], "non-concat dims must match"

    out_shape_nd = list(xs[0].shape)
    out_shape_nd[dim] = sum(x.shape[dim] for x in xs)
    out_shape_nd = tuple(out_shape_nd)

    # Degenerate / empty outputs.
    if any(s == 0 for s in out_shape_nd):
        return jnp.zeros(out_shape_nd, dtype)

    # Packed sub-byte dtypes: element offsets may not land on byte boundaries.
    # TODO(synk): bitcast-to-wider-container path for int4/fp4 concats.
    if any(tag in jnp.dtype(dtype).name for tag in _SUBBYTE_TAGS):
        return jnp.concatenate(xs, axis=dim)

    # Drop zero-width segments (they contribute nothing and would otherwise
    # produce zero-length DMA descriptors).
    xs = [x for x in xs if x.shape[dim] != 0]
    if len(xs) == 1:
        return xs[0]

    # Flatten to 2D: (outer, concat_dim * trailing).  Each input is then one
    # contiguous span of the output's last axis (lane-dense layout).
    outer = math.prod(xs[0].shape[:dim])
    trailing = math.prod(xs[0].shape[dim + 1:])
    inner_sizes = [x.shape[dim] * trailing for x in xs]
    total_inner = sum(inner_sizes)
    itemsize = jnp.dtype(dtype).itemsize
    xs2d = [x.reshape(outer, s) for x, s in zip(xs, inner_sizes)]

    gen = _tpu_gen_params()

    # Path selection: the DMA path writes `outer` strided lines of
    # s_i * itemsize bytes per input; if any line is short, per-descriptor
    # overhead tanks bandwidth -> use the tiled VMEM-staged path instead.
    min_line_bytes = min(s * itemsize for s in inner_sizes)
    use_dma = (outer == 1) or (min_line_bytes >= gen["threshold"])

    if use_dma:
        out2d = _concat_via_dma(xs2d, inner_sizes, outer, total_inner, dtype,
                                itemsize)
    else:
        out2d = _concat_via_vmem(xs2d, inner_sizes, outer, total_inner, dtype,
                                 itemsize, gen)

    return out2d.reshape(out_shape_nd)


class Concat:
    """JAX/Pallas port of the PyTorch Concat module (torch.cat as nn.Module)."""

    def __init__(self, dim):
        self.concat_dim = dim

    def __call__(self, x):
        return pallas_concat(list(x), self.concat_dim)


if __name__ == "__main__":
    key = jax.random.PRNGKey(0)
    ks = jax.random.split(key, 8)

    # Case 1: NCHW channel concat (matches the vision_transformer use case).
    x1 = jax.random.normal(ks[0], (2, 4, 16, 16), dtype=jnp.float32)
    x2 = jax.random.normal(ks[1], (2, 6, 16, 16), dtype=jnp.float32)
    x3 = jax.random.normal(ks[2], (2, 2, 16, 16), dtype=jnp.float32)
    out = jax.block_until_ready(Concat(dim=1)((x1, x2, x3)))
    ref = jnp.concatenate([x1, x2, x3], axis=1)
    assert out.shape == (2, 12, 16, 16) and out.dtype == jnp.float32
    assert jnp.array_equal(out, ref), "case 1 mismatch"

    # Case 2: leading-dim concat -> fully contiguous HBM->HBM DMA path.
    a = jax.random.normal(ks[3], (3, 8, 32), dtype=jnp.bfloat16)
    b = jax.random.normal(ks[4], (5, 8, 32), dtype=jnp.bfloat16)
    out2 = jax.block_until_ready(Concat(dim=0)((a, b)))
    assert jnp.array_equal(out2, jnp.concatenate([a, b], axis=0)), "case 2"

    # Case 3: narrow last-dim concat -> tiled VMEM-staged path on all gens.
    c = jax.random.normal(ks[5], (64, 8), dtype=jnp.float32)
    d = jax.random.normal(ks[6], (64, 16), dtype=jnp.float32)
    out3 = jax.block_until_ready(Concat(dim=-1)((c, d)))
    assert jnp.array_equal(out3, jnp.concatenate([c, d], axis=-1)), "case 3"

    # Case 4: degenerate — zero-width segment leaves a single effective input.
    e = jnp.zeros((2, 0, 4, 4), dtype=jnp.float32)
    f_ = jax.random.normal(ks[7], (2, 3, 4, 4), dtype=jnp.float32)
    out4 = jax.block_until_ready(Concat(dim=1)((e, f_)))
    assert jnp.array_equal(out4, jnp.concatenate([e, f_], axis=1)), "case 4"

    print("KERNEL_OK")
</pallas_src>

<mosaic_0001>
module attributes {stable_mosaic.version = 11 : i64} {
  func.func @kernel(%arg0: memref<2x1024xf32, #tpu.memory_space<any>>, %arg1: memref<2x1536xf32, #tpu.memory_space<any>>, %arg2: memref<2x512xf32, #tpu.memory_space<any>>, %arg3: memref<2x3072xf32, #tpu.memory_space<any>>, %arg4: memref<5x!tpu.dma_semaphore, #tpu.memory_space<semaphore_mem>>) attributes {dimension_semantics = [], scalar_prefetch = 0 : i64, scratch_operands = 1 : i64, tpu.core_type = #tpu.core_type<tc>} {
    %c0_i32 = arith.constant 0 : i32
    %c0_i32_0 = arith.constant 0 : i32
    %c0_i32_1 = arith.constant 0 : i32
    %0 = tpu.memref_slice %arg1[%c0_i32_0, %c0_i32_1] : memref<2x1536xf32, #tpu.memory_space<any>> -> memref<1x1536xf32, #tpu.memory_space<any>>
    %c0_i32_2 = arith.constant 0 : i32
    %c1024_i32 = arith.constant 1024 : i32
    %1 = tpu.memref_slice %arg3[%c0_i32_2, %c1024_i32] : memref<2x3072xf32, #tpu.memory_space<any>> -> memref<1x1536xf32, #tpu.memory_space<any>>
    %2 = tpu.memref_slice %arg4[%c0_i32] : memref<5x!tpu.dma_semaphore, #tpu.memory_space<semaphore_mem>> -> memref<1x!tpu.dma_semaphore, #tpu.memory_space<semaphore_mem>>
    %3 = tpu.memref_squeeze %2 : memref<1x!tpu.dma_semaphore, #tpu.memory_space<semaphore_mem>> -> memref<!tpu.dma_semaphore, #tpu.memory_space<semaphore_mem>>
    tpu.enqueue_dma source(%0 : memref<1x1536xf32, #tpu.memory_space<any>>) target(%1 : memref<1x1536xf32, #tpu.memory_space<any>>) target_semaphore(%3 : memref<!tpu.dma_semaphore, #tpu.memory_space<semaphore_mem>>)
    %c1_i32 = arith.constant 1 : i32
    %c1_i32_3 = arith.constant 1 : i32
    %c0_i32_4 = arith.constant 0 : i32
    %4 = tpu.memref_slice %arg1[%c1_i32_3, %c0_i32_4] : memref<2x1536xf32, #tpu.memory_space<any>> -> memref<1x1536xf32, #tpu.memory_space<any>>
    %c1_i32_5 = arith.constant 1 : i32
    %c1024_i32_6 = arith.constant 1024 : i32
    %5 = tpu.memref_slice %arg3[%c1_i32_5, %c1024_i32_6] : memref<2x3072xf32, #tpu.memory_space<any>> -> memref<1x1536xf32, #tpu.memory_space<any>>
    %6 = tpu.memref_slice %arg4[%c1_i32] : memref<5x!tpu.dma_semaphore, #tpu.memory_space<semaphore_mem>> -> memref<1x!tpu.dma_semaphore, #tpu.memory_space<semaphore_mem>>
    %7 = tpu.memref_squeeze %6 : memref<1x!tpu.dma_semaphore, #tpu.memory_space<semaphore_mem>> -> memref<!tpu.dma_semaphore, #tpu.memory_space<semaphore_mem>>
    tpu.enqueue_dma source(%4 : memref<1x1536xf32, #tpu.memory_space<any>>) target(%5 : memref<1x1536xf32, #tpu.memory_space<any>>) target_semaphore(%7 : memref<!tpu.dma_semaphore, #tpu.memory_space<semaphore_mem>>)
    %c2_i32 = arith.constant 2 : i32
    %c0_i32_7 = arith.constant 0 : i32
    %c0_i32_8 = arith.constant 0 : i32
    %8 = tpu.memref_slice %arg0[%c0_i32_7, %c0_i32_8] : memref<2x1024xf32, #tpu.memory_space<any>> -> memref<1x1024xf32, #tpu.memory_space<any>>
    %c0_i32_9 = arith.constant 0 : i32
    %c0_i32_10 = arith.constant 0 : i32
    %9 = tpu.memref_slice %arg3[%c0_i32_9, %c0_i32_10] : memref<2x3072xf32, #tpu.memory_space<any>> -> memref<1x1024xf32, #tpu.memory_space<any>>
    %10 = tpu.memref_slice %arg4[%c2_i32] : memref<5x!tpu.dma_semaphore, #tpu.memory_space<semaphore_mem>> -> memref<1x!tpu.dma_semaphore, #tpu.memory_space<semaphore_mem>>
    %11 = tpu.memref_squeeze %10 : memref<1x!tpu.dma_semaphore, #tpu.memory_space<semaphore_mem>> -> memref<!tpu.dma_semaphore, #tpu.memory_space<semaphore_mem>>
    tpu.enqueue_dma source(%8 : memref<1x1024xf32, #tpu.memory_space<any>>) target(%9 : memref<1x1024xf32, #tpu.memory_space<any>>) target_semaphore(%11 : memref<!tpu.dma_semaphore, #tpu.memory_space<semaphore_mem>>)
    %c3_i32 = arith.constant 3 : i32
    %c1_i32_11 = arith.constant 1 : i32
    %c0_i32_12 = arith.constant 0 : i32
    %12 = tpu.memref_slice %arg0[%c1_i32_11, %c0_i32_12] : memref<2x1024xf32, #tpu.memory_space<any>> -> memref<1x1024xf32, #tpu.memory_space<any>>
    %c1_i32_13 = arith.constant 1 : i32
    %c0_i32_14 = arith.constant 0 : i32
    %13 = tpu.memref_slice %arg3[%c1_i32_13, %c0_i32_14] : memref<2x3072xf32, #tpu.memory_space<any>> -> memref<1x1024xf32, #tpu.memory_space<any>>
    %14 = tpu.memref_slice %arg4[%c3_i32] : memref<5x!tpu.dma_semaphore, #tpu.memory_space<semaphore_mem>> -> memref<1x!tpu.dma_semaphore, #tpu.memory_space<semaphore_mem>>
    %15 = tpu.memref_squeeze %14 : memref<1x!tpu.dma_semaphore, #tpu.memory_space<semaphore_mem>> -> memref<!tpu.dma_semaphore, #tpu.memory_space<semaphore_mem>>
    tpu.enqueue_dma source(%12 : memref<1x1024xf32, #tpu.memory_space<any>>) target(%13 : memref<1x1024xf32, #tpu.memory_space<any>>) target_semaphore(%15 : memref<!tpu.dma_semaphore, #tpu.memory_space<semaphore_mem>>)
    %c4_i32 = arith.constant 4 : i32
    %c0_i32_15 = arith.constant 0 : i32
    %c0_i32_16 = arith.constant 0 : i32
    %16 = tpu.memref_slice %arg2[%c0_i32_15, %c0_i32_16] : memref<2x512xf32, #tpu.memory_space<any>> -> memref<2x512xf32, #tpu.memory_space<any>>
    %c0_i32_17 = arith.constant 0 : i32
    %c2560_i32 = arith.constant 2560 : i32
    %17 = tpu.memref_slice %arg3[%c0_i32_17, %c2560_i32] : memref<2x3072xf32, #tpu.memory_space<any>> -> memref<2x512xf32, #tpu.memory_space<any>>
    %18 = tpu.memref_slice %arg4[%c4_i32] : memref<5x!tpu.dma_semaphore, #tpu.memory_space<semaphore_mem>> -> memref<1x!tpu.dma_semaphore, #tpu.memory_space<semaphore_mem>>
    %19 = tpu.memref_squeeze %18 : memref<1x!tpu.dma_semaphore, #tpu.memory_space<semaphore_mem>> -> memref<!tpu.dma_semaphore, #tpu.memory_space<semaphore_mem>>
    tpu.enqueue_dma source(%16 : memref<2x512xf32, #tpu.memory_space<any>>) target(%17 : memref<2x512xf32, #tpu.memory_space<any>>) target_semaphore(%19 : memref<!tpu.dma_semaphore, #tpu.memory_space<semaphore_mem>>)
    %c0_i32_18 = arith.constant 0 : i32
    %c0_i32_19 = arith.constant 0 : i32
    %c0_i32_20 = arith.constant 0 : i32
    %20 = tpu.memref_slice %arg1[%c0_i32_19, %c0_i32_20] : memref<2x1536xf32, #tpu.memory_space<any>> -> memref<1x1536xf32, #tpu.memory_space<any>>
    %c0_i32_21 = arith.constant 0 : i32
    %c1024_i32_22 = arith.constant 1024 : i32
    %21 = tpu.memref_slice %arg3[%c0_i32_21, %c1024_i32_22] : memref<2x3072xf32, #tpu.memory_space<any>> -> memref<1x1536xf32, #tpu.memory_space<any>>
    %22 = tpu.memref_slice %arg4[%c0_i32_18] : memref<5x!tpu.dma_semaphore, #tpu.memory_space<semaphore_mem>> -> memref<1x!tpu.dma_semaphore, #tpu.memory_space<semaphore_mem>>
    %23 = tpu.memref_squeeze %22 : memref<1x!tpu.dma_semaphore, #tpu.memory_space<semaphore_mem>> -> memref<!tpu.dma_semaphore, #tpu.memory_space<semaphore_mem>>
    tpu.wait_dma2 semaphore(%23 : memref<!tpu.dma_semaphore, #tpu.memory_space<semaphore_mem>>) src(%20 : memref<1x1536xf32, #tpu.memory_space<any>>) dst(%21 : memref<1x1536xf32, #tpu.memory_space<any>>)
    %c1_i32_23 = arith.constant 1 : i32
    %c1_i32_24 = arith.constant 1 : i32
    %c0_i32_25 = arith.constant 0 : i32
    %24 = tpu.memref_slice %arg1[%c1_i32_24, %c0_i32_25] : memref<2x1536xf32, #tpu.memory_space<any>> -> memref<1x1536xf32, #tpu.memory_space<any>>
    %c1_i32_26 = arith.constant 1 : i32
    %c1024_i32_27 = arith.constant 1024 : i32
    %25 = tpu.memref_slice %arg3[%c1_i32_26, %c1024_i32_27] : memref<2x3072xf32, #tpu.memory_space<any>> -> memref<1x1536xf32, #tpu.memory_space<any>>
    %26 = tpu.memref_slice %arg4[%c1_i32_23] : memref<5x!tpu.dma_semaphore, #tpu.memory_space<semaphore_mem>> -> memref<1x!tpu.dma_semaphore, #tpu.memory_space<semaphore_mem>>
    %27 = tpu.memref_squeeze %26 : memref<1x!tpu.dma_semaphore, #tpu.memory_space<semaphore_mem>> -> memref<!tpu.dma_semaphore, #tpu.memory_space<semaphore_mem>>
    tpu.wait_dma2 semaphore(%27 : memref<!tpu.dma_semaphore, #tpu.memory_space<semaphore_mem>>) src(%24 : memref<1x1536xf32, #tpu.memory_space<any>>) dst(%25 : memref<1x1536xf32, #tpu.memory_space<any>>)
    %c2_i32_28 = arith.constant 2 : i32
    %c0_i32_29 = arith.constant 0 : i32
    %c0_i32_30 = arith.constant 0 : i32
    %28 = tpu.memref_slice %arg0[%c0_i32_29, %c0_i32_30] : memref<2x1024xf32, #tpu.memory_space<any>> -> memref<1x1024xf32, #tpu.memory_space<any>>
    %c0_i32_31 = arith.constant 0 : i32
    %c0_i32_32 = arith.constant 0 : i32
    %29 = tpu.memref_slice %arg3[%c0_i32_31, %c0_i32_32] : memref<2x3072xf32, #tpu.memory_space<any>> -> memref<1x1024xf32, #tpu.memory_space<any>>
    %30 = tpu.memref_slice %arg4[%c2_i32_28] : memref<5x!tpu.dma_semaphore, #tpu.memory_space<semaphore_mem>> -> memref<1x!tpu.dma_semaphore, #tpu.memory_space<semaphore_mem>>
    %31 = tpu.memref_squeeze %30 : memref<1x!tpu.dma_semaphore, #tpu.memory_space<semaphore_mem>> -> memref<!tpu.dma_semaphore, #tpu.memory_space<semaphore_mem>>
    tpu.wait_dma2 semaphore(%31 : memref<!tpu.dma_semaphore, #tpu.memory_space<semaphore_mem>>) src(%28 : memref<1x1024xf32, #tpu.memory_space<any>>) dst(%29 : memref<1x1024xf32, #tpu.memory_space<any>>)
    %c3_i32_33 = arith.constant 3 : i32
    %c1_i32_34 = arith.constant 1 : i32
    %c0_i32_35 = arith.constant 0 : i32
    %32 = tpu.memref_slice %arg0[%c1_i32_34, %c0_i32_35] : memref<2x1024xf32, #tpu.memory_space<any>> -> memref<1x1024xf32, #tpu.memory_space<any>>
    %c1_i32_36 = arith.constant 1 : i32
    %c0_i32_37 = arith.constant 0 : i32
    %33 = tpu.memref_slice %arg3[%c1_i32_36, %c0_i32_37] : memref<2x3072xf32, #tpu.memory_space<any>> -> memref<1x1024xf32, #tpu.memory_space<any>>
    %34 = tpu.memref_slice %arg4[%c3_i32_33] : memref<5x!tpu.dma_semaphore, #tpu.memory_space<semaphore_mem>> -> memref<1x!tpu.dma_semaphore, #tpu.memory_space<semaphore_mem>>
    %35 = tpu.memref_squeeze %34 : memref<1x!tpu.dma_semaphore, #tpu.memory_space<semaphore_mem>> -> memref<!tpu.dma_semaphore, #tpu.memory_space<semaphore_mem>>
    tpu.wait_dma2 semaphore(%35 : memref<!tpu.dma_semaphore, #tpu.memory_space<semaphore_mem>>) src(%32 : memref<1x1024xf32, #tpu.memory_space<any>>) dst(%33 : memref<1x1024xf32, #tpu.memory_space<any>>)
    %c4_i32_38 = arith.constant 4 : i32
    %c0_i32_39 = arith.constant 0 : i32
    %c0_i32_40 = arith.constant 0 : i32
    %36 = tpu.memref_slice %arg2[%c0_i32_39, %c0_i32_40] : memref<2x512xf32, #tpu.memory_space<any>> -> memref<2x512xf32, #tpu.memory_space<any>>
    %c0_i32_41 = arith.constant 0 : i32
    %c2560_i32_42 = arith.constant 2560 : i32
    %37 = tpu.memref_slice %arg3[%c0_i32_41, %c2560_i32_42] : memref<2x3072xf32, #tpu.memory_space<any>> -> memref<2x512xf32, #tpu.memory_space<any>>
    %38 = tpu.memref_slice %arg4[%c4_i32_38] : memref<5x!tpu.dma_semaphore, #tpu.memory_space<semaphore_mem>> -> memref<1x!tpu.dma_semaphore, #tpu.memory_space<semaphore_mem>>
    %39 = tpu.memref_squeeze %38 : memref<1x!tpu.dma_semaphore, #tpu.memory_space<semaphore_mem>> -> memref<!tpu.dma_semaphore, #tpu.memory_space<semaphore_mem>>
    tpu.wait_dma2 semaphore(%39 : memref<!tpu.dma_semaphore, #tpu.memory_space<semaphore_mem>>) src(%36 : memref<2x512xf32, #tpu.memory_space<any>>) dst(%37 : memref<2x512xf32, #tpu.memory_space<any>>)
    return
  }
}

</mosaic_0001>

<llo_original>
// kernel: tpu_custom_call.1
$region0: #{tpu_custom_call.1}
  #allocation0 [shape = 'u32[]', space=smem, size = 0x4, offset = 0x4, fixed_abs, tag = 'smem constant byte address 0x4 - core index']
  #allocation1 [shape = 'u32[144,128]{1,0:T(1,128)}', space=vmem, size = 0x12000, scoped, tag = 'internal scratch']
  #allocation2 [shape = 's32[5]{0}', space=sflag, size = 0x14, scoped, tag = 'scratch operand']
  #allocation3 [shape = 's32[]', space=sflag, size = 0x4, offset = 0, fixed_abs, tag = 'sflag constant byte address 0x0 - dummy sync flag']
  #allocation5 [shape = 's32[]', space=sflag, size = 0x4, offset = 0, fixed_abs, tag = 'sflag constant byte address 0x0 - dummy sync flag']
  #allocation7 [shape = 's32[]', space=sflag, size = 0x4, offset = 0, fixed_abs, tag = 'sflag constant byte address 0x0 - dummy sync flag']
  #allocation9 [shape = 's32[]', space=sflag, size = 0x4, offset = 0, fixed_abs, tag = 'sflag constant byte address 0x0 - dummy sync flag']
  #allocation11 [shape = 's32[]', space=sflag, size = 0x4, offset = 0, fixed_abs, tag = 'sflag constant byte address 0x0 - dummy sync flag']
  #allocation12 [shape = 'u32[0]{0}', space=smem, size = 0, offset = 0, fixed_abs, tag = 'smem constant byte address 0x0 - null']
  %s0 = inlined_call_operand.hbm [shape: f32[2,1024], index: 0, kind: input, shape index: {}]
  %s1 = inlined_call_operand.hbm [shape: f32[2,1536], index: 1, kind: input, shape index: {}]
  %s2 = inlined_call_operand.hbm [shape: f32[2,512], index: 2, kind: input, shape index: {}]
  %s3 = inlined_call_operand.hbm [shape: f32[2,3072], index: 3, kind: output, shape index: {}]
  %s4 = sld [smem:[#allocation0]]
  $region2: #{tpu_custom_call.1} parent=0
    _
  %s6 = ssub.s32 1, %s4
  %s7 = scalar_select 0, %s6, %s4
  $region1: #{tpu_custom_call.1} parent=0
    #allocation4 [shape = 'u32[3]{0}', space=smem, size = 0xc, scoped, tag = 'DMA stride descriptor']
    #allocation6 [shape = 'u32[3]{0}', space=smem, size = 0xc, scoped, tag = 'DMA stride descriptor']
    #allocation8 [shape = 'u32[3]{0}', space=smem, size = 0xc, scoped, tag = 'DMA stride descriptor']
    #allocation10 [shape = 'u32[3]{0}', space=smem, size = 0xc, scoped, tag = 'DMA stride descriptor']
    %s8 = scalar_lea.hbm %s3, 256
    %s10 = sshll.u32 1, 14
    %s11 = sxor.u32 4294967295, %s10
    %s14 = sshll.u32 3, 24
    %s15 = sxor.u32 4294967295, %s14
    %s16 = sand.u32 0, %s15
    %s18 = sor.u32 %s16, 0
    %21 = sst [smem:[#allocation4]] 32
    %s22 = scalar_lea.smem [#allocation4], 1
    %23 = sst [smem:[%s22]] 32
    %s24 = scalar_lea.smem [#allocation4], 2
    %25 = sst [smem:[%s24]] 1
    %27 = dma.general %s1, 192, %s8, [#allocation2], [#allocation3], [#allocation4], %s18, 0
    %s28 = scalar_lea.hbm %s1, 16
    %s29 = scalar_lea.hbm %s3, 272
    %s30 = scalar_lea.sflag [#allocation2], 1
    %s32 = sshll.u32 1, 14
    %s33 = sxor.u32 4294967295, %s32
    %s36 = sshll.u32 3, 24
    %s37 = sxor.u32 4294967295, %s36
    %s38 = sand.u32 0, %s37
    %s40 = sor.u32 %s38, 0
    %43 = sst [smem:[#allocation6]] 32
    %s44 = scalar_lea.smem [#allocation6], 1
    %45 = sst [smem:[%s44]] 32
    %s46 = scalar_lea.smem [#allocation6], 2
    %47 = sst [smem:[%s46]] 1
    %49 = dma.general %s28, 192, %s29, %s30, [#allocation5], [#allocation6], %s40, 0
    %s50 = scalar_lea.sflag [#allocation2], 2
    %s52 = sshll.u32 1, 14
    %s53 = sxor.u32 4294967295, %s52
    %s56 = sshll.u32 3, 24
    %s57 = sxor.u32 4294967295, %s56
    %s58 = sand.u32 0, %s57
    %s60 = sor.u32 %s58, 0
    %63 = sst [smem:[#allocation8]] 32
    %s64 = scalar_lea.smem [#allocation8], 1
    %65 = sst [smem:[%s64]] 32
    %s66 = scalar_lea.smem [#allocation8], 2
    %67 = sst [smem:[%s66]] 1
    %69 = dma.general %s0, 128, %s3, %s50, [#allocation7], [#allocation8], %s60, 0
    %s70 = scalar_lea.hbm %s0, 16
    %s71 = scalar_lea.hbm %s3, 16
    %s72 = scalar_lea.sflag [#allocation2], 3
    %s74 = sshll.u32 1, 14
    %s75 = sxor.u32 4294967295, %s74
    %s78 = sshll.u32 3, 24
    %s79 = sxor.u32 4294967295, %s78
    %s80 = sand.u32 0, %s79
    %s82 = sor.u32 %s80, 0
    %85 = sst [smem:[#allocation10]] 32
    %s86 = scalar_lea.smem [#allocation10], 1
    %87 = sst [smem:[%s86]] 32
    %s88 = scalar_lea.smem [#allocation10], 2
    %89 = sst [smem:[%s88]] 1
    %91 = dma.general %s70, 128, %s71, %s72, [#allocation9], [#allocation10], %s82, 0
    %s92 = scalar_lea.hbm %s3, 640
    %s93 = scalar_lea.sflag [#allocation2], 4
    %s95 = sshll.u32 1, 14
    %s96 = sxor.u32 4294967295, %s95
    %s99 = sshll.u32 3, 24
    %s100 = sxor.u32 4294967295, %s99
    %s101 = sand.u32 0, %s100
    %s103 = sor.u32 %s101, 0
    %106 = dma.general %s2, 128, %s92, %s93, [#allocation11], [#allocation12], %s103, 0
    %s107 = smul.u32 1, 12
    %s108 = sshll.u32 %s107, 4
    %109 = dma.done [#allocation2], %s108
    %s110 = sshll.u32 %s107, 4
    %111 = dma.done %s30, %s110
    %s112 = smul.u32 1, 8
    %s113 = sshll.u32 %s112, 4
    %114 = dma.done %s50, %s113
    %s115 = sshll.u32 %s112, 4
    %116 = dma.done %s72, %s115
    %s117 = smul.u32 2, 1
    %s118 = smul.u32 %s117, 4
    %s119 = sshll.u32 %s118, 4
    %120 = dma.done %s93, %s119
  %121 = vsyncmov [#allocation2]
  %s122 = vpop.sfrf %121
  %p123 = scmp.eq.s32.totalorder %s122, 0
  %p124 = pneg %p123
  %126 = shalt.err (%p124)
  %s127 = scalar_lea.sflag [#allocation2], 1
  %128 = vsyncmov %s127
  %s129 = vpop.sfrf %128
  %p130 = scmp.eq.s32.totalorder %s129, 0
  %p131 = pneg %p130
  %133 = shalt.err (%p131)
  %s134 = scalar_lea.sflag [#allocation2], 2
  %135 = vsyncmov %s134
  %s136 = vpop.sfrf %135
  %p137 = scmp.eq.s32.totalorder %s136, 0
  %p138 = pneg %p137
  %140 = shalt.err (%p138)
  %s141 = scalar_lea.sflag [#allocation2], 3
  %142 = vsyncmov %s141
  %s143 = vpop.sfrf %142
  %p144 = scmp.eq.s32.totalorder %s143, 0
  %p145 = pneg %p144
  %147 = shalt.err (%p145)
  %s148 = scalar_lea.sflag [#allocation2], 4
  %149 = vsyncmov %s148
  %s150 = vpop.sfrf %149
  %p151 = scmp.eq.s32.totalorder %s150, 0
  %p152 = pneg %p151
  %154 = shalt.err (%p152)

</llo_original>
